<compile_context>
chip_gen: v7x
topology: tpu7x:2x2x1
jax: 0.10.0
libtpu: 0.0.40
codegen_flags: <defaults>
</compile_context>

<pallas_src>
import functools

import jax
import jax.numpy as jnp
from jax.experimental import pallas as pl
from jax.experimental.pallas import tpu as pltpu

EPS = 1e-6  # torch F.pairwise_distance default eps (added to the difference)


def _triplet_loss_kernel(a_ref, p_ref, n_ref, out_ref, *,
                         batch_size, tile_rows, tiles_per_split, margin,
                         need_mask):
    c = pl.program_id(0)          # split (megacore) axis, "parallel"
    i = pl.program_id(1)          # batch-tile axis, "arbitrary" (accumulator)

    @pl.when(i == 0)
    def _():
        out_ref[...] = jnp.zeros_like(out_ref)

    # Stream tiles in their input dtype; upcast to f32 only for the math
    # (no-op when inputs are already f32).
    a = a_ref[...].astype(jnp.float32)
    p = p_ref[...].astype(jnp.float32)
    n = n_ref[...].astype(jnp.float32)

    dp = a - p + EPS
    dn = a - n + EPS
    dpos = jnp.sqrt(jnp.sum(dp * dp, axis=-1, keepdims=True))   # (TB, 1)
    dneg = jnp.sqrt(jnp.sum(dn * dn, axis=-1, keepdims=True))   # (TB, 1)
    losses = jnp.maximum(dpos - dneg + margin, 0.0)              # (TB, 1)

    if need_mask:
        # Only boundary / duplicated tiles pay for the iota + select.
        row0 = (c * tiles_per_split + i) * tile_rows

        @pl.when(row0 + tile_rows <= batch_size)
        def _():
            out_ref[...] += jnp.sum(losses)

        @pl.when(row0 + tile_rows > batch_size)
        def _():
            rows = row0 + jax.lax.broadcasted_iota(jnp.int32, (tile_rows, 1), 0)
            # Keep this a select: padded rows may hold garbage -> NaN losses.
            masked = jnp.where(rows < batch_size, losses, 0.0)
            out_ref[...] += jnp.sum(masked)
    else:
        out_ref[...] += jnp.sum(losses)


def _vmem_limit_bytes():
    """Scoped-VMEM limit to request, derived from the chip's physical VMEM."""
    cap = 64 << 20  # conservative fallback (v7x-safe)
    try:
        cap = int(pltpu.get_tpu_info().vmem_capacity_bytes)
    except Exception:
        pass
    # 0.7 * physical leaves headroom for compiler internal scratch; 64 MiB is
    # plenty for this mem-bound stream even on 128 MiB chips.
    return min(int(cap * 0.7), 64 << 20)


def _pick_tile_rows(batch, dim, dtype, vmem_budget):
    """Largest batch tile fitting the VMEM budget (lane/sublane-padding aware)."""
    itemsize = jnp.dtype(dtype).itemsize
    row_align = max(8, 32 // itemsize)          # 8 f32 / 16 bf16 / 32 int8
    d_pad = pl.cdiv(dim, 128) * 128             # lanes pad to 128
    bytes_per_row_in = d_pad * itemsize         # streamed input, VMEM-resident
    bytes_per_row_f32 = d_pad * 4               # f32 working copies
    # 3 inputs x 2 pipeline buffers + ~4 f32-sized live intermediates.
    bytes_per_row_total = 6 * bytes_per_row_in + 4 * bytes_per_row_f32
    tb = vmem_budget // bytes_per_row_total
    tb = max(row_align, (tb // row_align) * row_align)
    b_pad = pl.cdiv(batch, row_align) * row_align
    return int(min(tb, b_pad))                  # byte-capped only, no row cap


def triplet_loss(anchor: jax.Array, positive: jax.Array, negative: jax.Array,
                 *, margin: float = 1.0, tile_rows: int | None = None) -> jax.Array:
    """Computes TripletLoss(margin).forward(anchor, positive, negative).

    Inputs are (B, D); returns a scalar float32.
    """
    B, D = anchor.shape
    assert positive.shape == (B, D) and negative.shape == (B, D)

    dtype = anchor.dtype
    itemsize = jnp.dtype(dtype).itemsize
    row_align = max(8, 32 // itemsize)

    vmem_limit = _vmem_limit_bytes()
    tb = tile_rows if tile_rows is not None else _pick_tile_rows(B, D, dtype, vmem_limit)
    tb = max(row_align, (tb // row_align) * row_align)

    tiles_total = pl.cdiv(B, tb)
    # Always split the stream across two cores when there is more than one
    # tile, so v7x megacore never idles a TensorCore (odd counts included).
    n_split = 2 if tiles_total >= 2 else 1
    tiles_per_split = pl.cdiv(tiles_total, n_split)
    # Mask is needed if any block is ragged or duplicated (clamped surplus block).
    need_mask = (n_split * tiles_per_split * tb) != B

    kernel = functools.partial(
        _triplet_loss_kernel,
        batch_size=B, tile_rows=tb, tiles_per_split=tiles_per_split,
        margin=float(margin), need_mask=need_mask)

    last_block = tiles_total - 1
    clamp = (n_split * tiles_per_split) > tiles_total

    def in_map(c, i):
        blk = c * tiles_per_split + i
        if clamp:
            blk = jnp.minimum(blk, last_block)  # surplus block re-reads last tile
        return (blk, 0)

    in_spec = pl.BlockSpec((tb, D), in_map)

    cost = pl.CostEstimate(
        flops=int(8 * B * D),
        transcendentals=int(2 * B),
        bytes_accessed=int(3 * B * D * itemsize + n_split * 4),
    )

    partials = pl.pallas_call(
        kernel,
        out_shape=jax.ShapeDtypeStruct((n_split, 1), jnp.float32),
        grid=(n_split, tiles_per_split),
        in_specs=[in_spec, in_spec, in_spec],
        out_specs=pl.BlockSpec((1, 1), lambda c, i: (c, 0)),
        compiler_params=pltpu.CompilerParams(
            dimension_semantics=("parallel", "arbitrary"),
            vmem_limit_bytes=int(vmem_limit)),
        cost_estimate=cost,
    )(anchor, positive, negative)

    return jnp.sum(partials) / jnp.float32(B)


def _reference(a, p, n, margin=1.0):
    a = a.astype(jnp.float32); p = p.astype(jnp.float32); n = n.astype(jnp.float32)
    dp = jnp.sqrt(jnp.sum((a - p + EPS) ** 2, axis=-1))
    dn = jnp.sqrt(jnp.sum((a - n + EPS) ** 2, axis=-1))
    return jnp.mean(jnp.maximum(dp - dn + margin, 0.0))


if __name__ == "__main__":
    key = jax.random.PRNGKey(0)

    # 1) Small shape consistent with the module: batch=8, embedding dim=32.
    ka, kp, kn = jax.random.split(key, 3)
    B, D = 8, 32
    anchor = jax.random.normal(ka, (B, D), dtype=jnp.float32)
    positive = jax.random.normal(kp, (B, D), dtype=jnp.float32)
    negative = jax.random.normal(kn, (B, D), dtype=jnp.float32)
    loss = triplet_loss(anchor, positive, negative)
    jax.block_until_ready(loss)
    expected = _reference(anchor, positive, negative)
    assert jnp.allclose(loss, expected, rtol=1e-5, atol=1e-5), (loss, expected)

    # 2) Ragged batch + odd tile count (masked tail, clamped surplus block,
    #    2-way split engaged) with small forced tiles.
    ka2, kp2, kn2 = jax.random.split(jax.random.PRNGKey(1), 3)
    B2, D2 = 50, 128
    a2 = jax.random.normal(ka2, (B2, D2), dtype=jnp.float32)
    p2 = jax.random.normal(kp2, (B2, D2), dtype=jnp.float32)
    n2 = jax.random.normal(kn2, (B2, D2), dtype=jnp.float32)
    loss2 = triplet_loss(a2, p2, n2, tile_rows=8)
    jax.block_until_ready(loss2)
    expected2 = _reference(a2, p2, n2)
    assert jnp.allclose(loss2, expected2, rtol=1e-5, atol=1e-5), (loss2, expected2)

    # 3) Even tile count, exact tiling (mask statically skipped).
    ka3, kp3, kn3 = jax.random.split(jax.random.PRNGKey(2), 3)
    B3, D3 = 48, 64
    a3 = jax.random.normal(ka3, (B3, D3), dtype=jnp.float32)
    p3 = jax.random.normal(kp3, (B3, D3), dtype=jnp.float32)
    n3 = jax.random.normal(kn3, (B3, D3), dtype=jnp.float32)
    loss3 = triplet_loss(a3, p3, n3, tile_rows=8)
    jax.block_until_ready(loss3)
    expected3 = _reference(a3, p3, n3)
    assert jnp.allclose(loss3, expected3, rtol=1e-5, atol=1e-5), (loss3, expected3)

    # 4) bf16 inputs exercise the 16-row sublane alignment + f32 upcast path.
    ka4, kp4, kn4 = jax.random.split(jax.random.PRNGKey(3), 3)
    B4, D4 = 100, 64
    a4 = jax.random.normal(ka4, (B4, D4), dtype=jnp.bfloat16)
    p4 = jax.random.normal(kp4, (B4, D4), dtype=jnp.bfloat16)
    n4 = jax.random.normal(kn4, (B4, D4), dtype=jnp.bfloat16)
    loss4 = triplet_loss(a4, p4, n4, tile_rows=16)
    jax.block_until_ready(loss4)
    expected4 = _reference(a4, p4, n4)
    assert jnp.allclose(loss4, expected4, rtol=1e-4, atol=1e-4), (loss4, expected4)

    # 5) Auto tile-size path (byte-capped, no row cap) on a bigger batch.
    ka5, kp5, kn5 = jax.random.split(jax.random.PRNGKey(4), 3)
    B5, D5 = 1024, 256
    a5 = jax.random.normal(ka5, (B5, D5), dtype=jnp.float32)
    p5 = jax.random.normal(kp5, (B5, D5), dtype=jnp.float32)
    n5 = jax.random.normal(kn5, (B5, D5), dtype=jnp.float32)
    loss5 = triplet_loss(a5, p5, n5)
    jax.block_until_ready(loss5)
    expected5 = _reference(a5, p5, n5)
    assert jnp.allclose(loss5, expected5, rtol=1e-5, atol=1e-5), (loss5, expected5)

    print("KERNEL_OK")
</pallas_src>

<mosaic_0001>
module attributes {stable_mosaic.version = 11 : i64} {
  func.func @_triplet_loss_kernel(%arg0: i32, %arg1: i32, %arg2: memref<8x32xf32, #tpu.memory_space<vmem>>, %arg3: memref<8x32xf32, #tpu.memory_space<vmem>>, %arg4: memref<8x32xf32, #tpu.memory_space<vmem>>, %arg5: memref<1x1xf32, #tpu.memory_space<vmem>>) attributes {dimension_semantics = [#tpu.dimension_semantics<parallel>, #tpu.dimension_semantics<arbitrary>], iteration_bounds = array<i64: 1, 1>, scalar_prefetch = 0 : i64, scratch_operands = 0 : i64, tpu.core_type = #tpu.core_type<tc>, window_params = [{transform_indices = @transform_0, window_bounds = array<i64: 8, 32>}, {transform_indices = @transform_1, window_bounds = array<i64: 8, 32>}, {transform_indices = @transform_2, window_bounds = array<i64: 8, 32>}, {transform_indices = @transform_3, window_bounds = array<i64: 1, 1>}]} {
    %c0_i32 = arith.constant 0 : i32
    %0 = arith.cmpi eq, %arg1, %c0_i32 : i32
    %1 = arith.extui %0 : i1 to i32
    %c0_i32_0 = arith.constant 0 : i32
    %2 = arith.cmpi ne, %1, %c0_i32_0 : i32
    scf.if %2 {
      %cst_16 = arith.constant 0.000000e+00 : f32
      %33 = vector.broadcast %cst_16 : f32 to vector<1x1xf32>
      %c0_17 = arith.constant 0 : index
      %c0_18 = arith.constant 0 : index
      %34 = vector.load %arg5[%c0_17, %c0_18] : memref<1x1xf32, #tpu.memory_space<vmem>>, vector<1x1xf32>
      tpu.vector_store %arg5[%c0_17, %c0_18], %33 {strides = array<i32>} : memref<1x1xf32, #tpu.memory_space<vmem>>, vector<1x1xf32>,
    } else {
    }
    %c0 = arith.constant 0 : index
    %c0_1 = arith.constant 0 : index
    %3 = vector.load %arg2[%c0, %c0_1] : memref<8x32xf32, #tpu.memory_space<vmem>>, vector<8x32xf32>
    %c0_2 = arith.constant 0 : index
    %c0_3 = arith.constant 0 : index
    %4 = vector.load %arg3[%c0_2, %c0_3] : memref<8x32xf32, #tpu.memory_space<vmem>>, vector<8x32xf32>
    %c0_4 = arith.constant 0 : index
    %c0_5 = arith.constant 0 : index
    %5 = vector.load %arg4[%c0_4, %c0_5] : memref<8x32xf32, #tpu.memory_space<vmem>>, vector<8x32xf32>
    %6 = arith.subf %3, %4 : vector<8x32xf32>
    %cst = arith.constant 9.99999997E-7 : f32
    %7 = vector.broadcast %cst : f32 to vector<8x32xf32>
    %8 = arith.addf %6, %7 : vector<8x32xf32>
    %9 = arith.subf %3, %5 : vector<8x32xf32>
    %cst_6 = arith.constant 9.99999997E-7 : f32
    %10 = vector.broadcast %cst_6 : f32 to vector<8x32xf32>
    %11 = arith.addf %9, %10 : vector<8x32xf32>
    %12 = arith.mulf %8, %8 : vector<8x32xf32>
    %cst_7 = arith.constant dense<0.000000e+00> : vector<8xf32>
    %13 = vector.multi_reduction <add>, %12, %cst_7 [1] : vector<8x32xf32> to vector<8xf32>
    %14 = vector.shape_cast %13 : vector<8xf32> to vector<8x1xf32>
    %15 = math.sqrt %14 : vector<8x1xf32>
    %16 = arith.mulf %11, %11 : vector<8x32xf32>
    %cst_8 = arith.constant dense<0.000000e+00> : vector<8xf32>
    %17 = vector.multi_reduction <add>, %16, %cst_8 [1] : vector<8x32xf32> to vector<8xf32>
    %18 = vector.shape_cast %17 : vector<8xf32> to vector<8x1xf32>
    %19 = math.sqrt %18 : vector<8x1xf32>
    %20 = arith.subf %15, %19 : vector<8x1xf32>
    %cst_9 = arith.constant 1.000000e+00 : f32
    %21 = vector.broadcast %cst_9 : f32 to vector<8x1xf32>
    %22 = arith.addf %20, %21 : vector<8x1xf32>
    %cst_10 = arith.constant 0.000000e+00 : f32
    %23 = vector.broadcast %cst_10 : f32 to vector<8x1xf32>
    %24 = arith.maximumf %22, %23 : vector<8x1xf32>
    %c0_11 = arith.constant 0 : index
    %c0_12 = arith.constant 0 : index
    %25 = vector.load %arg5[%c0_11, %c0_12] : memref<1x1xf32, #tpu.memory_space<vmem>>, vector<1x1xf32>
    %26 = vector.shape_cast %24 : vector<8x1xf32> to vector<1x8x1xf32>
    %cst_13 = arith.constant dense<0.000000e+00> : vector<1xf32>
    %27 = vector.multi_reduction <add>, %26, %cst_13 [1, 2] : vector<1x8x1xf32> to vector<1xf32>
    %28 = vector.shape_cast %27 : vector<1xf32> to vector<1x1x1xf32>
    %29 = vector.extract %28[0, 0, 0] : f32 from vector<1x1x1xf32>
    %30 = vector.broadcast %29 : f32 to vector<1x1xf32>
    %31 = arith.addf %25, %30 : vector<1x1xf32>
    %c0_14 = arith.constant 0 : index
    %c0_15 = arith.constant 0 : index
    %32 = vector.load %arg5[%c0_14, %c0_15] : memref<1x1xf32, #tpu.memory_space<vmem>>, vector<1x1xf32>
    tpu.vector_store %arg5[%c0_14, %c0_15], %31 {strides = array<i32>} : memref<1x1xf32, #tpu.memory_space<vmem>>, vector<1x1xf32>,
    return
  }
  func.func @transform_0(%arg0: i32, %arg1: i32) -> (i32, i32) {
    %c1_i32 = arith.constant 1 : i32
    %0 = arith.muli %arg0, %c1_i32 : i32
    %1 = arith.addi %0, %arg1 : i32
    %c0_i32 = arith.constant 0 : i32
    %c0_i32_0 = arith.constant 0 : i32
    return %1, %c0_i32 : i32, i32
  }
  func.func @transform_1(%arg0: i32, %arg1: i32) -> (i32, i32) {
    %c1_i32 = arith.constant 1 : i32
    %0 = arith.muli %arg0, %c1_i32 : i32
    %1 = arith.addi %0, %arg1 : i32
    %c0_i32 = arith.constant 0 : i32
    %c0_i32_0 = arith.constant 0 : i32
    return %1, %c0_i32 : i32, i32
  }
  func.func @transform_2(%arg0: i32, %arg1: i32) -> (i32, i32) {
    %c1_i32 = arith.constant 1 : i32
    %0 = arith.muli %arg0, %c1_i32 : i32
    %1 = arith.addi %0, %arg1 : i32
    %c0_i32 = arith.constant 0 : i32
    %c0_i32_0 = arith.constant 0 : i32
    return %1, %c0_i32 : i32, i32
  }
  func.func @transform_3(%arg0: i32, %arg1: i32) -> (i32, i32) {
    %c0_i32 = arith.constant 0 : i32
    %c0_i32_0 = arith.constant 0 : i32
    return %arg0, %c0_i32 : i32, i32
  }
}

</mosaic_0001>

<llo_original>
// kernel: tpu_custom_call.1
$region0: #{tpu_custom_call.1}
  #allocation0 [shape = 'u32[]', space=smem, size = 0x4, offset = 0x4, fixed_abs, tag = 'smem constant byte address 0x4 - core index']
  #allocation1 [shape = 'u32[144,128]{1,0:T(1,128)}', space=vmem, size = 0x12000, scoped, tag = 'internal scratch']
  %s0 = inlined_call_operand.hbm [shape: f32[8,32], index: 0, kind: input, shape index: {}]
  %s1 = inlined_call_operand.hbm [shape: f32[8,32], index: 1, kind: input, shape index: {}]
  %s2 = inlined_call_operand.hbm [shape: f32[8,32], index: 2, kind: input, shape index: {}]
  %s3 = inlined_call_operand.hbm [shape: f32[1,1], index: 3, kind: output, shape index: {}]
  %s4 = sld [smem:[#allocation0]]
  $region38: #{tpu_custom_call.1} parent=0
    _
  %s6 = ssub.s32 1, %s4
  %s7 = scalar_select 0, %s6, %s4
  $region1: #{tpu_custom_call.1} parent=0
    #allocation2 [shape = 'u8[4096]{0}', space=vmem, size = 0x1000, scoped, tag = 'input window, operand 0, single buffered']
    #allocation3 [shape = 's32[1]{0}', space=sflag, size = 0x4, scoped, tag = 'scoped memory for tpu_custom_call.1']
    #allocation4 [shape = 's32[1]{0}', space=sflag, size = 0x4, scoped, tag = 'scoped memory for tpu_custom_call.1']
    #allocation5 [shape = 'u8[4096]{0}', space=vmem, size = 0x1000, scoped, tag = 'input window, operand 1, single buffered']
    #allocation6 [shape = 's32[1]{0}', space=sflag, size = 0x4, scoped, tag = 'scoped memory for tpu_custom_call.1']
    #allocation7 [shape = 'u8[4096]{0}', space=vmem, size = 0x1000, scoped, tag = 'input window, operand 2, single buffered']
    #allocation8 [shape = 'u8[512]{0}', space=vmem, size = 0x400, scoped, tag = 'output window, operand 0, single buffered']
    %8 = vsyncpa [#allocation3], 0
    %9 = vsyncpa [#allocation6], 0
    %10 = vsyncpa [#allocation4], 0
    // Predicated region
    $region2: #{tpu_custom_call.1} parent=1 // pred_check
      _
    $region3: #{tpu_custom_call.1} parent=1 // pred_check_branch
      %12 = sbr.rel (0) target = $region5
    $region4: #{tpu_custom_call.1} parent=1 // pred_region
      %s13 = sadd.s32 0, 0
      %s15 = ssub.s32 128, 128
      %16 = vsyncadd [#allocation3], %s15
      %s17 = smul.addr %s13, 128
      %s18 = scalar_lea.hbm %s0, %s17
      %s20 = sshll.u32 [#allocation2], 4
      %s21 = int_to_ptr.vmem [resolvable:$true] %s20
      %23 = dma.hbm_to_vmem [thread:$0]  %s18, 128, %s21, [#allocation3]
    $region5: #{tpu_custom_call.1} parent=1 // pred_fallthru
      _
    // Predicated region
    $region6: #{tpu_custom_call.1} parent=1 // pred_check
      _
    $region7: #{tpu_custom_call.1} parent=1 // pred_check_branch
      %25 = sbr.rel (0) target = $region9
    $region8: #{tpu_custom_call.1} parent=1 // pred_region
      %s26 = sadd.s32 0, 0
      %s28 = ssub.s32 128, 128
      %29 = vsyncadd [#allocation6], %s28
      %s30 = smul.addr %s26, 128
      %s31 = scalar_lea.hbm %s1, %s30
      %s33 = sshll.u32 [#allocation5], 4
      %s34 = int_to_ptr.vmem [resolvable:$true] %s33
      %36 = dma.hbm_to_vmem [thread:$0]  %s31, 128, %s34, [#allocation6]
    $region9: #{tpu_custom_call.1} parent=1 // pred_fallthru
      _
    // Predicated region
    $region10: #{tpu_custom_call.1} parent=1 // pred_check
      _
    $region11: #{tpu_custom_call.1} parent=1 // pred_check_branch
      %38 = sbr.rel (0) target = $region13
    $region12: #{tpu_custom_call.1} parent=1 // pred_region
      %s39 = sadd.s32 0, 0
      %s41 = ssub.s32 128, 128
      %42 = vsyncadd [#allocation6], %s41
      %s43 = smul.addr %s39, 128
      %s44 = scalar_lea.hbm %s2, %s43
      %s46 = sshll.u32 [#allocation7], 4
      %s47 = int_to_ptr.vmem [resolvable:$true] %s46
      %49 = dma.hbm_to_vmem [thread:$0]  %s44, 128, %s47, [#allocation6]
    $region13: #{tpu_custom_call.1} parent=1 // pred_fallthru
      _
    // Predicated region
    $region14: #{tpu_custom_call.1} parent=1 // pred_check
      _
    $region15: #{tpu_custom_call.1} parent=1 // pred_check_branch
      %51 = sbr.rel (0) target = $region17
    $region16: #{tpu_custom_call.1} parent=1 // pred_region
      %52 = dma.done [#allocation3], 128
    $region17: #{tpu_custom_call.1} parent=1 // pred_fallthru
      _
    // Predicated region
    $region18: #{tpu_custom_call.1} parent=1 // pred_check
      _
    $region19: #{tpu_custom_call.1} parent=1 // pred_check_branch
      %54 = sbr.rel (0) target = $region21
    $region20: #{tpu_custom_call.1} parent=1 // pred_region
      %55 = dma.done [#allocation6], 128
    $region21: #{tpu_custom_call.1} parent=1 // pred_fallthru
      _
    // Predicated region
    $region22: #{tpu_custom_call.1} parent=1 // pred_check
      _
    $region23: #{tpu_custom_call.1} parent=1 // pred_check_branch
      %57 = sbr.rel (0) target = $region25
    $region24: #{tpu_custom_call.1} parent=1 // pred_region
      %58 = dma.done [#allocation6], 128
    $region25: #{tpu_custom_call.1} parent=1 // pred_fallthru
      _
    %s59 = sadd.s32 0, 0
    %s60 = sadd.s32 0, 0
    %s61 = sadd.s32 0, 0
    %p62 = scmp.eq.s32.totalorder 0, 0
    // Predicated region
    $region26: #{tpu_custom_call.1} parent=1 // pred_check
      %p63 = pneg %p62
    $region27: #{tpu_custom_call.1} parent=1 // pred_check_branch
      %65 = sbr.rel (%p63) target = $region29
    $region28: #{tpu_custom_call.1} parent=1 // pred_region
      %vm66 = vcmask 0
      %67 = vst.msk [vmem:[#allocation8] sm:$0x1] %vm66, 0.0
    $region29: #{tpu_custom_call.1} parent=1 // pred_fallthru
      _
    %v68 = vld [vmem:[#allocation2] sm:$0xff]
    %v69 = vld [vmem:[#allocation5] sm:$0xff]
    %v70 = vld [vmem:[#allocation7] sm:$0xff]
    %v71 = vsub.f32 %v68, %v69
    %v72 = vadd.f32 %v71, 1e-06
    %v73 = vsub.f32 %v68, %v70
    %v74 = vadd.f32 %v73, 1e-06
    %v75 = vmul.f32 %v72, %v72
    %vm76 = vcmask 261120
    %v77 = vsel %vm76, %v75, 0.0
    %78 = vadd.xlane.f32.xlu0 %v77
    %v79 = vpop.xlane.xlu0 %78
    %v80 = vrsqrt.pop %v79
    %v81 = vmul.f32 %v79, %v80
    %vm82 = vcmp.eq.f32.partialorder %v79, inf
    %v83 = vsel %vm82, %v79, %v81
    %vm84 = vcmp.eq.f32.partialorder %v79, 0.0
    %v85 = vand.u32 %v79, 2147483648
    %v86 = vsel %vm84, %v85, %v83
    %v87 = vmul.f32 %v74, %v74
    %v88 = vsel %vm76, %v87, 0.0
    %89 = vadd.xlane.f32.xlu0 %v88
    %v90 = vpop.xlane.xlu0 %89
    %v91 = vrsqrt.pop %v90
    %v92 = vmul.f32 %v90, %v91
    %vm93 = vcmp.eq.f32.partialorder %v90, inf
    %v94 = vsel %vm93, %v90, %v92
    %vm95 = vcmp.eq.f32.partialorder %v90, 0.0
    %v96 = vand.u32 %v90, 2147483648
    %v97 = vsel %vm95, %v96, %v94
    %v98 = vsub.f32 %v86, %v97
    %v99 = vadd.f32 %v98, 1.0
    %v100 = vmax.f32 %v99, 0.0
    %v101 = vld [vmem:[#allocation8] sm:$0x1]
    %vm102 = vcmask 7168
    %v103 = vsel %vm102, %v100, 0.0
    %104 = vadd.xlane.f32.xlu0 %v103
    %v105 = vpop.xlane.xlu0 %104
    %v106 = vrot.slane %v105, 4
    %v107 = vadd.f32 %v105, %v106
    %v108 = vrot.slane %v107, 2
    %v109 = vadd.f32 %v107, %v108
    %v110 = vrot.slane %v109, 1
    %v111 = vadd.f32 %v109, %v110
    %s112 = vtos %v111
    %v113 = vstv %s112
    %v114 = vadd.f32 %v101, %v113
    %vm115 = vcmask 0
    %116 = vst.msk [vmem:[#allocation8] sm:$0x1] %vm115, %v114
    // Predicated region
    $region30: #{tpu_custom_call.1} parent=1 // pred_check
      _
    $region31: #{tpu_custom_call.1} parent=1 // pred_check_branch
      %118 = sbr.rel (0) target = $region33
    $region32: #{tpu_custom_call.1} parent=1 // pred_region
      %s120 = ssub.s32 16, 16
      %121 = vsyncadd [#allocation4], %s120
      %s123 = sshll.u32 [#allocation8], 4
      %s124 = int_to_ptr.vmem [resolvable:$true] %s123
      %126 = dma.vmem_to_hbm [thread:$0]  %s124, 16, %s3, [#allocation4]
    $region33: #{tpu_custom_call.1} parent=1 // pred_fallthru
      _
    // Predicated region
    $region34: #{tpu_custom_call.1} parent=1 // pred_check
      _
    $region35: #{tpu_custom_call.1} parent=1 // pred_check_branch
      %128 = sbr.rel (0) target = $region37
    $region36: #{tpu_custom_call.1} parent=1 // pred_region
      %129 = dma.done [#allocation4], 16
    $region37: #{tpu_custom_call.1} parent=1 // pred_fallthru
      _
    %130 = vsyncpa [#allocation3], 1
    %131 = vsyncpa [#allocation6], 1
    %132 = vsyncpa [#allocation4], 1

</llo_original>
